<compile_context>
chip_gen: v7x
topology: tpu7x:2x2x1
jax: 0.10.0
libtpu: 0.0.40
codegen_flags: <defaults>
</compile_context>

<pallas_src>
import functools

import jax
import jax.numpy as jnp
from jax import lax
from jax.experimental import pallas as pl
from jax.experimental.pallas import tpu as pltpu

LANE = 128
MAX_TB = 32768  # keeps per-step VMEM (~0.7 KiB per lane) far below v7x budget


def _round_up(x, m):
    return ((x + m - 1) // m) * m


def _cdiv(a, b):
    return (a + b - 1) // b


# ----------------------------- kernel ----------------------------------------
def critic_mlp_kernel(x_ref, w1_ref, b1_ref, w2_ref, b2_ref, w3_ref, b3_ref,
                      o_ref):
    """Fused 3-layer MLP.  Batch rides the lane axis of every intermediate.

    x_ref : (TB, D_IN) f32   batch-major block, streamed per grid step
    w*    : (out,  in) bf16  VMEM-resident across grid steps
    b*    : (out,  1)  f32
    o_ref : (1,    TB) f32   lane-dense output store
    """
    # Cast streamed x to bf16 in-kernel (idle VPU); MXU accumulates in f32.
    x = x_ref[...].astype(w1_ref.dtype)                       # (TB, D_IN) bf16
    # layer 1: contract d_in of W1[h1, d_in] and x[TB, d_in] -> (h1, TB)
    h = lax.dot_general(w1_ref[...], x,
                        dimension_numbers=(((1,), (1,)), ((), ())),
                        preferred_element_type=jnp.float32)
    h = jnp.maximum(h + b1_ref[...], 0.0).astype(w2_ref.dtype)
    # layer 2: W2 @ h + b2, ReLU
    h = jnp.dot(w2_ref[...], h, preferred_element_type=jnp.float32)
    h = jnp.maximum(h + b2_ref[...], 0.0).astype(w3_ref.dtype)
    # value head: W3[1, H2] @ h[H2, TB] -> lane-dense (1, TB)
    o_ref[...] = (jnp.dot(w3_ref[...], h, preferred_element_type=jnp.float32)
                  + b3_ref[...]).astype(o_ref.dtype)


# ----------------------------- wrapper ----------------------------------------
@functools.partial(jax.jit,
                   static_argnames=("block_b", "param_dtype", "core_parallel"))
def critic_forward(x, w1, b1, w2, b2, w3, b3, *, block_b=16384,
                   param_dtype=jnp.bfloat16, core_parallel=False):
    """Critic forward pass.

    x  : [B, D_IN] f32  (streamed as-is; no transpose/cast/pad pass)
    w_i: [out, in] (PyTorch nn.Linear weight layout)
    b_i: [out]
    core_parallel: set True on v7x (2 TensorCores/chip) to shard the batch
                   grid across cores; leave False on v5e/v6e.
    returns [B, 1] f32
    """
    B, d_in = x.shape
    h1 = w1.shape[0]
    h2 = w2.shape[0]

    # ---- batch tiling -------------------------------------------------------
    tb_cap = min(_round_up(max(int(block_b), LANE), LANE), MAX_TB)
    if B <= tb_cap:
        # Single full-extent block: valid for any B, zero padding.
        tb = B
        n_steps = 1
    else:
        # 128-multiple tiles; last x block may be ragged (reads clamp).
        tb = tb_cap
        n_steps = _cdiv(B, tb)
    if core_parallel and n_steps < 2 and B >= 2 * LANE:
        # Ensure >=2 grid steps so the batch axis can split across both TCs.
        tb = _round_up(_cdiv(B, 2), LANE)
        n_steps = _cdiv(B, tb)
    b_pad = n_steps * tb            # output buffer columns (writes in-bounds)
    assert b_pad % tb == 0

    # Tiny parameters: cast once, keep VMEM-resident via constant index_maps.
    w1q = w1.astype(param_dtype)
    w2q = w2.astype(param_dtype)
    w3q = w3.astype(param_dtype)
    b1c = b1.astype(jnp.float32).reshape(h1, 1)
    b2c = b2.astype(jnp.float32).reshape(h2, 1)
    b3c = b3.astype(jnp.float32).reshape(1, 1)

    p_bytes = jnp.dtype(param_dtype).itemsize
    cost = pl.CostEstimate(
        flops=2 * B * (d_in * h1 + h1 * h2 + h2),
        transcendentals=0,
        bytes_accessed=(B * d_in * 4                        # streamed f32 x
                        + b_pad * 4                         # output
                        + (d_in * h1 + h1 * h2 + h2) * p_bytes
                        + (h1 + h2 + 1) * 4),
    )

    resident = lambda shape: pl.BlockSpec(shape, lambda i: (0, 0))
    semantics = (pltpu.CORE_PARALLEL,) if core_parallel else ("parallel",)

    out = pl.pallas_call(
        critic_mlp_kernel,
        out_shape=jax.ShapeDtypeStruct((1, b_pad), jnp.float32),
        grid=(n_steps,),
        in_specs=[
            pl.BlockSpec((tb, d_in), lambda i: (i, 0)),     # pipelined x stream
            resident(w1q.shape), resident(b1c.shape),
            resident(w2q.shape), resident(b2c.shape),
            resident(w3q.shape), resident(b3c.shape),
        ],
        out_specs=pl.BlockSpec((1, tb), lambda i: (0, i)),  # lane-dense store
        compiler_params=pltpu.CompilerParams(dimension_semantics=semantics),
        cost_estimate=cost,
    )(x, w1q, b1c, w2q, b2c, w3q, b3c)

    return out[0, :B].reshape(B, 1)


# ----------------------------- reference --------------------------------------
def critic_ref(x, w1, b1, w2, b2, w3, b3, param_dtype=jnp.bfloat16):
    """Pure-JAX reference mirroring the kernel's bf16-operand / f32-accum math."""
    q = lambda a: a.astype(param_dtype).astype(jnp.float32)
    h = jnp.maximum(q(x) @ q(w1).T + b1, 0.0)
    h = jnp.maximum(q(h) @ q(w2).T + b2, 0.0)
    return (q(h) @ q(w3).T + b3).reshape(-1, 1)


# ----------------------------- init --------------------------------------------
def orthogonal_init(key, shape, scale):
    # TODO(synk): approximates nn.init.orthogonal_ (QR of an n x n normal matrix,
    # then slice); exact PyTorch semantics are outside the kernel's scope.
    rows, cols = shape
    n = max(rows, cols)
    a = jax.random.normal(key, (n, n), dtype=jnp.float32)
    q_mat, _ = jnp.linalg.qr(a)
    return (scale * q_mat[:rows, :cols]).astype(jnp.float32)


if __name__ == "__main__":
    # Shapes implied by the module: state_dim + goal_dim = 16 + 8 = 24,
    # hidden_dim = [32, 32], output = 1.
    D_IN, H1, H2 = 16 + 8, 32, 32
    INIT_SCALING = 1.0

    key = jax.random.PRNGKey(0)
    k1, k2, k3, kb1, kb2, kb3, kx1, kx2, kx3 = jax.random.split(key, 9)

    # Weights in PyTorch nn.Linear layout [out, in]; small nonzero biases so the
    # bias path of the kernel is actually exercised.
    w1 = orthogonal_init(k1, (H1, D_IN), INIT_SCALING)
    w2 = orthogonal_init(k2, (H2, H1), INIT_SCALING)
    w3 = orthogonal_init(k3, (1, H2), INIT_SCALING)
    b1 = 0.1 * jax.random.normal(kb1, (H1,), dtype=jnp.float32)
    b2 = 0.1 * jax.random.normal(kb2, (H2,), dtype=jnp.float32)
    b3 = 0.1 * jax.random.normal(kb3, (1,), dtype=jnp.float32)

    # (batch, key, block_b) cases:
    #  B=8   : single full-extent block (no padding, tiny batch)
    #  B=384 : 3 evenly-dividing 128-wide grid steps
    #  B=200 : ragged last x block + padded output buffer (sliced back to B)
    for B, kx, blk in ((8, kx1, 16384), (384, kx2, 128), (200, kx3, 128)):
        x = jax.random.normal(kx, (B, D_IN), dtype=jnp.float32)
        out = jax.block_until_ready(
            critic_forward(x, w1, b1, w2, b2, w3, b3, block_b=blk))
        ref = critic_ref(x, w1, b1, w2, b2, w3, b3)
        assert out.shape == (B, 1), out.shape
        assert jnp.allclose(out, ref, atol=2e-2, rtol=2e-2), (
            float(jnp.max(jnp.abs(out - ref))))

    print("KERNEL_OK")
</pallas_src>

<mosaic_0001>
module attributes {stable_mosaic.version = 11 : i64} {
  func.func @critic_mlp_kernel(%arg0: i32, %arg1: memref<8x24xf32, #tpu.memory_space<vmem>>, %arg2: memref<32x24xbf16, #tpu.memory_space<vmem>>, %arg3: memref<32x1xf32, #tpu.memory_space<vmem>>, %arg4: memref<32x32xbf16, #tpu.memory_space<vmem>>, %arg5: memref<32x1xf32, #tpu.memory_space<vmem>>, %arg6: memref<1x32xbf16, #tpu.memory_space<vmem>>, %arg7: memref<1x1xf32, #tpu.memory_space<vmem>>, %arg8: memref<1x8xf32, #tpu.memory_space<vmem>>) attributes {dimension_semantics = [#tpu.dimension_semantics<parallel>], iteration_bounds = array<i64: 1>, scalar_prefetch = 0 : i64, scratch_operands = 0 : i64, tpu.core_type = #tpu.core_type<tc>, window_params = [{transform_indices = @transform_0, window_bounds = array<i64: 8, 24>}, {pipeline_mode = #tpu.pipeline_mode<synchronous>, transform_indices = @transform_1, window_bounds = array<i64: 32, 24>}, {pipeline_mode = #tpu.pipeline_mode<synchronous>, transform_indices = @transform_2, window_bounds = array<i64: 32, 1>}, {pipeline_mode = #tpu.pipeline_mode<synchronous>, transform_indices = @transform_3, window_bounds = array<i64: 32, 32>}, {pipeline_mode = #tpu.pipeline_mode<synchronous>, transform_indices = @transform_4, window_bounds = array<i64: 32, 1>}, {pipeline_mode = #tpu.pipeline_mode<synchronous>, transform_indices = @transform_5, window_bounds = array<i64: 1, 32>}, {pipeline_mode = #tpu.pipeline_mode<synchronous>, transform_indices = @transform_6, window_bounds = array<i64: 1, 1>}, {transform_indices = @transform_7, window_bounds = array<i64: 1, 8>}]} {
    %c0 = arith.constant 0 : index
    %c0_0 = arith.constant 0 : index
    %0 = vector.load %arg1[%c0, %c0_0] : memref<8x24xf32, #tpu.memory_space<vmem>>, vector<8x24xf32>
    %1 = arith.truncf %0 : vector<8x24xf32> to vector<8x24xbf16>
    %c0_1 = arith.constant 0 : index
    %c0_2 = arith.constant 0 : index
    %2 = vector.load %arg2[%c0_1, %c0_2] : memref<32x24xbf16, #tpu.memory_space<vmem>>, vector<32x24xbf16>
    %cst = arith.constant dense<0.000000e+00> : vector<32x8xf32>
    %3 = tpu.matmul %2, %1, %cst {dimension_numbers = #tpu.dot_dimension_numbers<[1], [1], [0], [0], [0, 0, 1, 0], [], []>} : vector<32x24xbf16>, vector<8x24xbf16>, vector<32x8xf32> -> vector<32x8xf32>
    %c0_3 = arith.constant 0 : index
    %c0_4 = arith.constant 0 : index
    %4 = vector.load %arg3[%c0_3, %c0_4] : memref<32x1xf32, #tpu.memory_space<vmem>>, vector<32x1xf32>
    %5 = vector.broadcast %4 : vector<32x1xf32> to vector<32x8xf32>
    %6 = arith.addf %3, %5 : vector<32x8xf32>
    %cst_5 = arith.constant 0.000000e+00 : f32
    %7 = vector.broadcast %cst_5 : f32 to vector<32x8xf32>
    %8 = arith.maximumf %6, %7 : vector<32x8xf32>
    %9 = arith.truncf %8 : vector<32x8xf32> to vector<32x8xbf16>
    %c0_6 = arith.constant 0 : index
    %c0_7 = arith.constant 0 : index
    %10 = vector.load %arg4[%c0_6, %c0_7] : memref<32x32xbf16, #tpu.memory_space<vmem>>, vector<32x32xbf16>
    %cst_8 = arith.constant dense<0.000000e+00> : vector<32x8xf32>
    %11 = tpu.matmul %10, %9, %cst_8 {dimension_numbers = #tpu.dot_dimension_numbers<[1], [0], [0], [1], [0, 0, 1, 1], [], []>} : vector<32x32xbf16>, vector<32x8xbf16>, vector<32x8xf32> -> vector<32x8xf32>
    %c0_9 = arith.constant 0 : index
    %c0_10 = arith.constant 0 : index
    %12 = vector.load %arg5[%c0_9, %c0_10] : memref<32x1xf32, #tpu.memory_space<vmem>>, vector<32x1xf32>
    %13 = vector.broadcast %12 : vector<32x1xf32> to vector<32x8xf32>
    %14 = arith.addf %11, %13 : vector<32x8xf32>
    %cst_11 = arith.constant 0.000000e+00 : f32
    %15 = vector.broadcast %cst_11 : f32 to vector<32x8xf32>
    %16 = arith.maximumf %14, %15 : vector<32x8xf32>
    %17 = arith.truncf %16 : vector<32x8xf32> to vector<32x8xbf16>
    %c0_12 = arith.constant 0 : index
    %c0_13 = arith.constant 0 : index
    %18 = vector.load %arg6[%c0_12, %c0_13] : memref<1x32xbf16, #tpu.memory_space<vmem>>, vector<1x32xbf16>
    %cst_14 = arith.constant dense<0.000000e+00> : vector<1x8xf32>
    %19 = tpu.matmul %18, %17, %cst_14 {dimension_numbers = #tpu.dot_dimension_numbers<[1], [0], [0], [1], [0, 0, 1, 1], [], []>} : vector<1x32xbf16>, vector<32x8xbf16>, vector<1x8xf32> -> vector<1x8xf32>
    %c0_15 = arith.constant 0 : index
    %c0_16 = arith.constant 0 : index
    %20 = vector.load %arg7[%c0_15, %c0_16] : memref<1x1xf32, #tpu.memory_space<vmem>>, vector<1x1xf32>
    %21 = vector.broadcast %20 : vector<1x1xf32> to vector<1x8xf32>
    %22 = arith.addf %19, %21 : vector<1x8xf32>
    %c0_17 = arith.constant 0 : index
    %c0_18 = arith.constant 0 : index
    %23 = vector.load %arg8[%c0_17, %c0_18] : memref<1x8xf32, #tpu.memory_space<vmem>>, vector<1x8xf32>
    tpu.vector_store %arg8[%c0_17, %c0_18], %22 {strides = array<i32>} : memref<1x8xf32, #tpu.memory_space<vmem>>, vector<1x8xf32>,
    return
  }
  func.func @transform_0(%arg0: i32) -> (i32, i32) {
    %c0_i32 = arith.constant 0 : i32
    %c0_i32_0 = arith.constant 0 : i32
    return %arg0, %c0_i32 : i32, i32
  }
  func.func @transform_1(%arg0: i32) -> (i32, i32) {
    %c0_i32 = arith.constant 0 : i32
    %c0_i32_0 = arith.constant 0 : i32
    %c0_i32_1 = arith.constant 0 : i32
    return %c0_i32, %c0_i32_0 : i32, i32
  }
  func.func @transform_2(%arg0: i32) -> (i32, i32) {
    %c0_i32 = arith.constant 0 : i32
    %c0_i32_0 = arith.constant 0 : i32
    %c0_i32_1 = arith.constant 0 : i32
    return %c0_i32, %c0_i32_0 : i32, i32
  }
  func.func @transform_3(%arg0: i32) -> (i32, i32) {
    %c0_i32 = arith.constant 0 : i32
    %c0_i32_0 = arith.constant 0 : i32
    %c0_i32_1 = arith.constant 0 : i32
    return %c0_i32, %c0_i32_0 : i32, i32
  }
  func.func @transform_4(%arg0: i32) -> (i32, i32) {
    %c0_i32 = arith.constant 0 : i32
    %c0_i32_0 = arith.constant 0 : i32
    %c0_i32_1 = arith.constant 0 : i32
    return %c0_i32, %c0_i32_0 : i32, i32
  }
  func.func @transform_5(%arg0: i32) -> (i32, i32) {
    %c0_i32 = arith.constant 0 : i32
    %c0_i32_0 = arith.constant 0 : i32
    %c0_i32_1 = arith.constant 0 : i32
    return %c0_i32, %c0_i32_0 : i32, i32
  }
  func.func @transform_6(%arg0: i32) -> (i32, i32) {
    %c0_i32 = arith.constant 0 : i32
    %c0_i32_0 = arith.constant 0 : i32
    %c0_i32_1 = arith.constant 0 : i32
    return %c0_i32, %c0_i32_0 : i32, i32
  }
  func.func @transform_7(%arg0: i32) -> (i32, i32) {
    %c0_i32 = arith.constant 0 : i32
    %c0_i32_0 = arith.constant 0 : i32
    return %c0_i32, %arg0 : i32, i32
  }
}

</mosaic_0001>

<llo_original>
// kernel: critic_forward.1
$region0: #{critic_forward.1}
  #allocation0 [shape = 'u32[]', space=smem, size = 0x4, offset = 0x4, fixed_abs, tag = 'smem constant byte address 0x4 - core index']
  #allocation1 [shape = 'u32[144,128]{1,0:T(1,128)}', space=vmem, size = 0x12000, scoped, tag = 'internal scratch']
  #allocation2 [shape = 'f32[1,1]{1,0:T(1,128)S(1)}', space=vmem, size = 0x200, scoped, tag = 'scoped memory for critic_forward.1']
  %s0 = inlined_call_operand.vmem [shape: f32[8,24], index: 0, kind: input, shape index: {}]
  %s1 = inlined_call_operand.vmem [shape: bf16[32,24], index: 1, kind: input, shape index: {}]
  %s2 = inlined_call_operand.vmem [shape: f32[32,1], index: 2, kind: input, shape index: {}]
  %s3 = inlined_call_operand.vmem [shape: bf16[32,32], index: 3, kind: input, shape index: {}]
  %s4 = inlined_call_operand.vmem [shape: f32[32,1], index: 4, kind: input, shape index: {}]
  %s5 = inlined_call_operand.vmem [shape: bf16[1,32], index: 5, kind: input, shape index: {}]
  %s6 = inlined_call_operand.<no memory space> [shape: f32[1,1], index: 6, kind: input, shape index: {}]
  %s7 = inlined_call_operand.hbm [shape: f32[1,8], index: 7, kind: output, shape index: {}]
  %s8 = sld [smem:[#allocation0]]
  $region38: #{critic_forward.1} parent=0
    _
  %s10 = ssub.s32 1, %s8
  %s11 = scalar_select 0, %s10, %s8
  %v12 = vstv %s6
  %13 = vst [vmem:[#allocation2] sm:$0x1] %v12
  $region1: #{critic_forward.1} parent=0
    #allocation3 [shape = 'u8[512]{0}', space=vmem, size = 0x400, scoped, tag = 'output window, operand 0, single buffered']
    #allocation4 [shape = 's32[1]{0}', space=sflag, size = 0x4, scoped, tag = 'scoped memory for critic_forward.1']
    %14 = vsyncpa [#allocation4], 0
    // Predicated region
    $region2: #{critic_forward.1} parent=1 // pred_check
      _
    $region3: #{critic_forward.1} parent=1 // pred_check_branch
      %16 = sbr.rel (0) target = $region5
    $region4: #{critic_forward.1} parent=1 // pred_region
      _
    $region5: #{critic_forward.1} parent=1 // pred_fallthru
      _
    // Predicated region
    $region6: #{critic_forward.1} parent=1 // pred_check
      _
    $region7: #{critic_forward.1} parent=1 // pred_check_branch
      %18 = sbr.rel (0) target = $region9
    $region8: #{critic_forward.1} parent=1 // pred_region
      _
    $region9: #{critic_forward.1} parent=1 // pred_fallthru
      _
    // Predicated region
    $region10: #{critic_forward.1} parent=1 // pred_check
      _
    $region11: #{critic_forward.1} parent=1 // pred_check_branch
      %20 = sbr.rel (0) target = $region13
    $region12: #{critic_forward.1} parent=1 // pred_region
      _
    $region13: #{critic_forward.1} parent=1 // pred_fallthru
      _
    // Predicated region
    $region14: #{critic_forward.1} parent=1 // pred_check
      _
    $region15: #{critic_forward.1} parent=1 // pred_check_branch
      %22 = sbr.rel (0) target = $region17
    $region16: #{critic_forward.1} parent=1 // pred_region
      _
    $region17: #{critic_forward.1} parent=1 // pred_fallthru
      _
    // Predicated region
    $region18: #{critic_forward.1} parent=1 // pred_check
      _
    $region19: #{critic_forward.1} parent=1 // pred_check_branch
      %24 = sbr.rel (0) target = $region21
    $region20: #{critic_forward.1} parent=1 // pred_region
      _
    $region21: #{critic_forward.1} parent=1 // pred_fallthru
      _
    // Predicated region
    $region22: #{critic_forward.1} parent=1 // pred_check
      _
    $region23: #{critic_forward.1} parent=1 // pred_check_branch
      %26 = sbr.rel (0) target = $region25
    $region24: #{critic_forward.1} parent=1 // pred_region
      _
    $region25: #{critic_forward.1} parent=1 // pred_fallthru
      _
    // Predicated region
    $region26: #{critic_forward.1} parent=1 // pred_check
      _
    $region27: #{critic_forward.1} parent=1 // pred_check_branch
      %28 = sbr.rel (0) target = $region29
    $region28: #{critic_forward.1} parent=1 // pred_region
      _
    $region29: #{critic_forward.1} parent=1 // pred_fallthru
      _
    %v30 = vld [vmem:[%s0] sm:$0xff]
    %v31 = vpack.c.bf16 %v30, %v30
    %v32 = vld [vmem:[%s1] sm:$0xf]
    %v33 = vld [vmem:[%s1 + $0x4] sm:$0xf]
    %v34 = vld [vmem:[%s1 + $0x8] sm:$0xf]
    %v35 = vld [vmem:[%s1 + $0xc] sm:$0xf]
    %v36 = vld [vmem:[%s2] sm:$0xff]
    %v37 = vld [vmem:[%s2 + $0x8] sm:$0xff]
    %v38 = vld [vmem:[%s2 + $0x10] sm:$0xff]
    %v39 = vld [vmem:[%s2 + $0x18] sm:$0xff]
    %41 = vset.pattern.permute.xlu0 0
    %42 = vperm.xlu0 %41, %v36
    %v43 = vpop.permute.xlu0 %42
    %46 = vset.pattern.permute.xlu0 0
    %47 = vperm.xlu0 %46, %v37
    %v48 = vpop.permute.xlu0 %47
    %51 = vset.pattern.permute.xlu0 0
    %52 = vperm.xlu0 %51, %v38
    %v53 = vpop.permute.xlu0 %52
    %56 = vset.pattern.permute.xlu0 0
    %57 = vperm.xlu0 %56, %v39
    %v58 = vpop.permute.xlu0 %57
    %v64 = vunpack.c.l.b16 %v32
    %v65 = vunpack.c.l.b16 %v33
    %v66 = vunpack.c.l.b16 %v34
    %v67 = vunpack.c.l.b16 %v35
    %v68 = vpack.c.b16 %v65, %v64
    %v69 = vpack.c.b16 %v67, %v66
    %vm70 = vcmask 195584
    %v72 = vsel %vm70, %v68, 0
    %v75 = vsel %vm70, %v69, 0
    %v78 = vsel %vm70, %v31, 0
    %80 = vmatprep.subr.bf16.mxu0 0
    %81 = vmatpush1.bf16.xpose.msra.mxu0 %v78
    %82 = vmatprep.subr.bf16.mxu0 0
    %83 = vmatpush1.bf16.xpose.msra.mxu0 0
    %84 = vmatprep.subr.bf16.mxu0 0
    %85 = vmatpush1.bf16.xpose.msra.mxu0 0
    %86 = vmatprep.subr.bf16.mxu0 0
    %87 = vmatpush1.bf16.xpose.msra.mxu0 0
    %88 = vmatprep.subr.bf16.mxu0 0
    %89 = vmatpush1.bf16.xpose.msra.mxu0 0
    %90 = vmatprep.subr.bf16.mxu0 0
    %91 = vmatpush1.bf16.xpose.msra.mxu0 0
    %92 = vmatprep.subr.bf16.mxu0 0
    %93 = vmatpush1.bf16.xpose.msra.mxu0 0
    %94 = vmatprep.subr.bf16.mxu0 0
    %95 = vmatpush1.bf16.xpose.msra.mxu0 0
    %96 = vmatprep.subr.bf16.mxu0 0
    %97 = vmatpush1.bf16.xpose.msra.mxu0 0
    %98 = vmatprep.subr.bf16.mxu0 0
    %99 = vmatpush1.bf16.xpose.msra.mxu0 0
    %100 = vmatprep.subr.bf16.mxu0 0
    %101 = vmatpush1.bf16.xpose.msra.mxu0 0
    %102 = vmatprep.subr.bf16.mxu0 0
    %103 = vmatpush1.bf16.xpose.msra.mxu0 0
    %104 = vmatprep.subr.bf16.mxu0 0
    %105 = vmatpush1.bf16.xpose.msra.mxu0 0
    %106 = vmatprep.subr.bf16.mxu0 0
    %107 = vmatpush1.bf16.xpose.msra.mxu0 0
    %108 = vmatprep.subr.bf16.mxu0 0
    %109 = vmatpush1.bf16.xpose.msra.mxu0 0
    %110 = vmatprep.subr.bf16.mxu0 0
    %111 = vmatpush1.bf16.xpose.msra.mxu0 0
    %112 = vmatprep.mubr.bf16.mxu0 0
    %113 = vmatmul.mubr.bf16.gmra.mrb[0].mxu0 %v72
    %v114 = vpop.f32.mrb[0].mxu0
    %v115 = vadd.f32 %v43, %v114
    %v116 = vpop.f32.mrb[0].mxu0
    %v117 = vpop.f32.mrb[0].mxu0
    %v118 = vadd.f32 %v48, %v117
    %v119 = vpop.f32.mrb[0].mxu0
    %120 = vmatprep.mubr.bf16.mxu0 0
    %121 = vmatmul.mubr.bf16.gmra.mrb[0].mxu0 %v75
    %v122 = vpop.f32.mrb[0].mxu0
    %v123 = vadd.f32 %v53, %v122
    %v124 = vpop.f32.mrb[0].mxu0
    %v125 = vpop.f32.mrb[0].mxu0
    %v126 = vadd.f32 %v58, %v125
    %v127 = vpop.f32.mrb[0].mxu0
    %128 = vdwg.mxu0
    %v129 = vmax.f32 %v115, 0.0
    %v130 = vmax.f32 %v118, 0.0
    %v131 = vmax.f32 %v123, 0.0
    %v132 = vmax.f32 %v126, 0.0
    %v133 = vpack.c.bf16 %v130, %v129
    %v134 = vpack.c.bf16 %v132, %v131
    %v135 = vld [vmem:[%s3] sm:$0xf]
    %v136 = vld [vmem:[%s3 + $0x4] sm:$0xf]
    %v137 = vld [vmem:[%s3 + $0x8] sm:$0xf]
    %v138 = vld [vmem:[%s3 + $0xc] sm:$0xf]
    %v139 = vld [vmem:[%s4] sm:$0xff]
    %v140 = vld [vmem:[%s4 + $0x8] sm:$0xff]
    %v141 = vld [vmem:[%s4 + $0x10] sm:$0xff]
    %v142 = vld [vmem:[%s4 + $0x18] sm:$0xff]
    %144 = vset.pattern.permute.xlu0 0
    %145 = vperm.xlu0 %144, %v139
    %v146 = vpop.permute.xlu0 %145
    %149 = vset.pattern.permute.xlu0 0
    %150 = vperm.xlu0 %149, %v140
    %v151 = vpop.permute.xlu0 %150
    %154 = vset.pattern.permute.xlu0 0
    %155 = vperm.xlu0 %154, %v141
    %v156 = vpop.permute.xlu0 %155
    %159 = vset.pattern.permute.xlu0 0
    %160 = vperm.xlu0 %159, %v142
    %v161 = vpop.permute.xlu0 %160
    %v167 = vunpack.c.l.b16 %v135
    %v168 = vunpack.c.l.b16 %v136
    %v169 = vunpack.c.l.b16 %v137
    %v170 = vunpack.c.l.b16 %v138
    %v171 = vpack.c.b16 %v168, %v167
    %v172 = vpack.c.b16 %v170, %v169
    %vm173 = vcmask 261120
    %v175 = vsel %vm173, %v171, 0
    %v178 = vsel %vm173, %v172, 0
    %180 = vmatprep.subr.bf16.mxu0 0
    %181 = vmatpush1.bf16.msra.mxu0 %v133
    %182 = vmatprep.subr.bf16.mxu0 0
    %183 = vmatpush1.bf16.msra.mxu0 %v134
    %184 = vmatprep.subr.bf16.mxu0 0
    %185 = vmatpush1.bf16.msra.mxu0 0
    %186 = vmatprep.subr.bf16.mxu0 0
    %187 = vmatpush1.bf16.msra.mxu0 0
    %188 = vmatprep.subr.bf16.mxu0 0
    %189 = vmatpush1.bf16.msra.mxu0 0
    %190 = vmatprep.subr.bf16.mxu0 0
    %191 = vmatpush1.bf16.msra.mxu0 0
    %192 = vmatprep.subr.bf16.mxu0 0
    %193 = vmatpush1.bf16.msra.mxu0 0
    %194 = vmatprep.subr.bf16.mxu0 0
    %195 = vmatpush1.bf16.msra.mxu0 0
    %196 = vmatprep.subr.bf16.mxu0 0
    %197 = vmatpush1.bf16.msra.mxu0 0
    %198 = vmatprep.subr.bf16.mxu0 0
    %199 = vmatpush1.bf16.msra.mxu0 0
    %200 = vmatprep.subr.bf16.mxu0 0
    %201 = vmatpush1.bf16.msra.mxu0 0
    %202 = vmatprep.subr.bf16.mxu0 0
    %203 = vmatpush1.bf16.msra.mxu0 0
    %204 = vmatprep.subr.bf16.mxu0 0
    %205 = vmatpush1.bf16.msra.mxu0 0
    %206 = vmatprep.subr.bf16.mxu0 0
    %207 = vmatpush1.bf16.msra.mxu0 0
    %208 = vmatprep.subr.bf16.mxu0 0
    %209 = vmatpush1.bf16.msra.mxu0 0
    %210 = vmatprep.subr.bf16.mxu0 0
    %211 = vmatpush1.bf16.msra.mxu0 0
    %212 = vmatprep.mubr.bf16.mxu0 0
    %213 = vmatmul.mubr.bf16.gmra.mrb[0].mxu0 %v175
    %v214 = vpop.f32.mrb[0].mxu0
    %v215 = vadd.f32 %v146, %v214
    %v216 = vpop.f32.mrb[0].mxu0
    %v217 = vpop.f32.mrb[0].mxu0
    %v218 = vadd.f32 %v151, %v217
    %v219 = vpop.f32.mrb[0].mxu0
    %220 = vmatprep.mubr.bf16.mxu0 0
    %221 = vmatmul.mubr.bf16.gmra.mrb[0].mxu0 %v178
    %v222 = vpop.f32.mrb[0].mxu0
    %v223 = vadd.f32 %v156, %v222
    %v224 = vpop.f32.mrb[0].mxu0
    %v225 = vpop.f32.mrb[0].mxu0
    %v226 = vadd.f32 %v161, %v225
    %v227 = vpop.f32.mrb[0].mxu0
    %228 = vdwg.mxu0
    %v229 = vmax.f32 %v215, 0.0
    %v230 = vmax.f32 %v218, 0.0
    %v231 = vmax.f32 %v223, 0.0
    %v232 = vmax.f32 %v226, 0.0
    %v233 = vpack.c.bf16 %v230, %v229
    %v234 = vpack.c.bf16 %v232, %v231
    %v235 = vld [vmem:[%s5] sm:$0x1]
    %v236 = vld [vmem:[#allocation2] sm:$0x1]
    %238 = vset.pattern.permute.xlu0 0
    %239 = vperm.xlu0 %238, %v236
    %v240 = vpop.permute.xlu0 %239
    %v242 = vlaneseq
    %v243 = vshrl.u32 %v242, 7
    %v244 = vsub.s32 0, %v243
    %v245 = vrot.slane %v240, %v244
    %v247 = vsel %vm173, %v235, 0
    %249 = vmatprep.subr.bf16.mxu0 0
    %250 = vmatpush1.bf16.msra.mxu0 %v233
    %251 = vmatprep.subr.bf16.mxu0 0
    %252 = vmatpush1.bf16.msra.mxu0 %v234
    %253 = vmatprep.subr.bf16.mxu0 0
    %254 = vmatpush1.bf16.msra.mxu0 0
    %255 = vmatprep.subr.bf16.mxu0 0
    %256 = vmatpush1.bf16.msra.mxu0 0
    %257 = vmatprep.subr.bf16.mxu0 0
    %258 = vmatpush1.bf16.msra.mxu0 0
    %259 = vmatprep.subr.bf16.mxu0 0
    %260 = vmatpush1.bf16.msra.mxu0 0
    %261 = vmatprep.subr.bf16.mxu0 0
    %262 = vmatpush1.bf16.msra.mxu0 0
    %263 = vmatprep.subr.bf16.mxu0 0
    %264 = vmatpush1.bf16.msra.mxu0 0
    %265 = vmatprep.subr.bf16.mxu0 0
    %266 = vmatpush1.bf16.msra.mxu0 0
    %267 = vmatprep.subr.bf16.mxu0 0
    %268 = vmatpush1.bf16.msra.mxu0 0
    %269 = vmatprep.subr.bf16.mxu0 0
    %270 = vmatpush1.bf16.msra.mxu0 0
    %271 = vmatprep.subr.bf16.mxu0 0
    %272 = vmatpush1.bf16.msra.mxu0 0
    %273 = vmatprep.subr.bf16.mxu0 0
    %274 = vmatpush1.bf16.msra.mxu0 0
    %275 = vmatprep.subr.bf16.mxu0 0
    %276 = vmatpush1.bf16.msra.mxu0 0
    %277 = vmatprep.subr.bf16.mxu0 0
    %278 = vmatpush1.bf16.msra.mxu0 0
    %279 = vmatprep.subr.bf16.mxu0 0
    %280 = vmatpush1.bf16.msra.mxu0 0
    %281 = vmatprep.mubr.bf16.mxu0 0
    %282 = vmatmul.mubr.bf16.gmra.mrb[0].mxu0 %v247
    %v283 = vpop.f32.mrb[0].mxu0
    %v284 = vadd.f32 %v245, %v283
    %v285 = vpop.f32.mrb[0].mxu0
    %v286 = vpop.f32.mrb[0].mxu0
    %v287 = vpop.f32.mrb[0].mxu0
    %288 = vdwg.mxu0
    %vm289 = vcmask 57344
    %290 = vst.msk [vmem:[#allocation3] sm:$0x1] %vm289, %v284
    // Predicated region
    $region30: #{critic_forward.1} parent=1 // pred_check
      _
    $region31: #{critic_forward.1} parent=1 // pred_check_branch
      %292 = sbr.rel (0) target = $region33
    $region32: #{critic_forward.1} parent=1 // pred_region
      %s294 = ssub.s32 16, 16
      %295 = vsyncadd [#allocation4], %s294
      %s297 = sshll.u32 [#allocation3], 4
      %s298 = int_to_ptr.vmem [resolvable:$true] %s297
      %300 = dma.vmem_to_hbm [thread:$0]  %s298, 16, %s7, [#allocation4]
    $region33: #{critic_forward.1} parent=1 // pred_fallthru
      _
    // Predicated region
    $region34: #{critic_forward.1} parent=1 // pred_check
      _
    $region35: #{critic_forward.1} parent=1 // pred_check_branch
      %302 = sbr.rel (0) target = $region37
    $region36: #{critic_forward.1} parent=1 // pred_region
      %303 = dma.done [#allocation4], 16
    $region37: #{critic_forward.1} parent=1 // pred_fallthru
      _
    %304 = vsyncpa [#allocation4], 1

</llo_original>
